<compile_context>
chip_gen: v7x
topology: tpu7x:2x2x1
jax: 0.10.0
libtpu: 0.0.40
codegen_flags: <defaults>
</compile_context>

<pallas_src>
import math
import functools

import jax
import jax.numpy as jnp
from jax.experimental import pallas as pl
from jax.experimental.pallas import tpu as pltpu


# ----------------------------------------------------------------------------
# Pallas kernel
# ----------------------------------------------------------------------------
def _symmetry_net_kernel(scal_ref, x_ref, w_in_ref, b_in_ref, w_h_ref, b_h_ref,
                         w_out_ref, out_ref, h_ref, *,
                         n_hidden_layers, pi_over_L, act_dtype):
    """One point-tile of the SymmetrySwitchNet forward pass (lane-dense layout).

    scal_ref  : SMEM (2,)        [sign (+1/-1), output-layer bias]
    x_ref     : (1, TN)          input points (points on the lane axis)
    w_in_ref  : (H, 1)  f32      input_layer weight  (Linear(1, H), column)
    b_in_ref  : (H, 1)  f32      input_layer bias    (column)
    w_h_ref   : (L-1, H, H) f32  hidden weights, PyTorch (out, in) layout
    b_h_ref   : (L-1, H, 1) f32  hidden biases (columns)
    w_out_ref : (H, 1)  f32      output layer weight as a column
    out_ref   : (1, TN) f32      parametrically-converted network output
    h_ref     : VMEM scratch (H, 2*TN) act_dtype — fused ±x activations
    """
    x = x_ref[...]                                   # (1, TN) f32
    sign = scal_ref[0]                               # SMEM scalar
    b_out = scal_ref[1]                              # SMEM scalar
    tn = x.shape[-1]

    # ---- input layer (VPU outer product; ±x fused without a concat copy) ----
    w_in = w_in_ref[...]                             # (H, 1)
    b_in = b_in_ref[...]                             # (H, 1)
    t = w_in * x                                     # (H, TN) — shared by ±x
    # tanh(w_in*(-x) + b_in) == tanh(b_in - t): reuse t, write both lane halves.
    h_ref[:, :tn] = jnp.tanh(t + b_in).astype(act_dtype)
    h_ref[:, tn:] = jnp.tanh(b_in - t).astype(act_dtype)
    h = h_ref[...]                                   # (H, 2*TN) act_dtype

    # ---- shared hidden layers: bf16 MXU operands, f32 accumulate ------------
    # wk cast is tiny (H*H = 1024 elems/layer per grid step); accumulate + bias
    # + tanh stay in f32, then cast back to the resident activation dtype.
    for k in range(n_hidden_layers - 1):
        wk = w_h_ref[k].astype(jnp.bfloat16)         # (H, H)
        bk = b_h_ref[k]                              # (H, 1) f32
        acc = jnp.dot(wk, h.astype(jnp.bfloat16),
                      preferred_element_type=jnp.float32)   # (H, 2*TN) f32
        h = jnp.tanh(acc + bk).astype(act_dtype)

    # ---- output layer: VPU multiply + sublane reduce (skip 1-row MXU op) ----
    w_out = w_out_ref[...]                           # (H, 1) f32 column
    hf = h.astype(jnp.float32)
    o = jnp.tanh(jnp.sum(w_out * hf, axis=0, keepdims=True) + b_out)  # (1, 2*TN)

    # ---- split fused batch (TN is a multiple of 128 -> vreg boundary) -------
    x_out = o[:, :tn]                                # f(+x)
    x_neg_out = o[:, tn:]                            # f(-x)
    out = x_out + sign * x_neg_out                   # symmetric / antisymmetric
    g = jnp.cos(pi_over_L * x)                       # parametric_conversion
    out_ref[...] = g * out                           # lane-dense store


# ----------------------------------------------------------------------------
# Wrapper helpers
# ----------------------------------------------------------------------------
def _default_act_dtype():
    """bf16 resident activations on v6e/v7x; f32 on v5e/older (no bf16 VPU/EUP)."""
    try:
        kind = jax.devices()[0].device_kind.lower()
    except Exception:
        return jnp.float32
    if any(tag in kind for tag in ("v2", "v3", "v4", "v5")):
        return jnp.float32
    return jnp.bfloat16


def _default_tile_n(n):
    """Largest multiple-of-128 divisor of n that is <= min(8192, n//2).

    Guarantees grid >= 2 (keeps both v7x TensorCores busy) while keeping tiles
    big enough to amortize the ~0.35 us per-step overhead. VMEM stays tiny
    (~1 MiB / 8K points for the (32, 2*TN) activations)."""
    if n <= 128:
        return n
    cap = max(128, min(8192, n // 2))
    t = (cap // 128) * 128
    while t > 128 and n % t != 0:
        t -= 128
    return t if n % t == 0 else n


# ----------------------------------------------------------------------------
# Wrapper
# ----------------------------------------------------------------------------
def symmetry_switch_net_forward(input_pts, params, *, n_hidden_layers,
                                domain_extrema, symmetry=False,
                                tile_n=None, act_dtype=None):
    """JAX/Pallas equivalent of SymmetrySwitchNet.forward (activation = tanh)."""
    N, D = input_pts.shape
    assert D == 1, "input_dimension must be 1 (matches parametric_conversion)"
    H = params["w_in"].shape[0]
    L_layers = n_hidden_layers - 1
    assert L_layers >= 1

    xL, xR = domain_extrema
    pi_over_L = math.pi / (xR - xL)

    if act_dtype is None:
        act_dtype = _default_act_dtype()

    # --- glue: scalar switch decision ---------------------------------------
    # switch_val = sigmoid(symmetry_neuron(1.0)); switch = (switch_val>=0.5) or symmetry
    switch_val = jax.nn.sigmoid(params["sym_w"][0, 0] + params["sym_b"][0])
    switch = jnp.logical_or(switch_val >= 0.5, jnp.asarray(bool(symmetry)))
    sign = jnp.where(switch, 1.0, -1.0).astype(jnp.float32)
    b_out = params["b_out"].reshape(()).astype(jnp.float32)
    scal = jnp.stack([sign, b_out])                  # (2,) -> SMEM scalars

    # --- eigenvalue head: constant broadcast, no kernel needed ---------------
    ev_const = (params["ev_w"][0, 0] + params["ev_b"][0]).astype(jnp.float32)
    ev = jnp.full((N, 1), ev_const, jnp.float32)

    # --- point tiling: lane-dense tiles, point axis last ---------------------
    if tile_n is None:
        tile_n = _default_tile_n(N)
    TN = tile_n
    assert N % 128 == 0, "pad N to a multiple of 128 in the caller (mask/drop the tail)"
    assert N % TN == 0 and TN % 128 == 0, "tile_n must divide N and be a multiple of 128"
    grid = (N // TN,)

    x_row = input_pts.astype(jnp.float32).reshape(1, N)   # points on lanes
    w_out_col = params["w_out_row"].astype(jnp.float32).T.reshape(H, 1)

    kernel = functools.partial(_symmetry_net_kernel,
                               n_hidden_layers=n_hidden_layers,
                               pi_over_L=pi_over_L,
                               act_dtype=act_dtype)

    out_row = pl.pallas_call(
        kernel,
        out_shape=jax.ShapeDtypeStruct((1, N), jnp.float32),
        grid=grid,
        in_specs=[
            pl.BlockSpec(memory_space=pltpu.MemorySpace.SMEM),    # scal (2,)
            pl.BlockSpec((1, TN), lambda i: (0, i)),              # x tile (lanes)
            pl.BlockSpec((H, 1), lambda i: (0, 0)),               # w_in (col)
            pl.BlockSpec((H, 1), lambda i: (0, 0)),               # b_in (col)
            pl.BlockSpec((L_layers, H, H), lambda i: (0, 0, 0)),  # hidden W
            pl.BlockSpec((L_layers, H, 1), lambda i: (0, 0, 0)),  # hidden b
            pl.BlockSpec((H, 1), lambda i: (0, 0)),               # w_out (col)
        ],
        out_specs=pl.BlockSpec((1, TN), lambda i: (0, i)),        # lane-dense out
        scratch_shapes=[pltpu.VMEM((H, 2 * TN), act_dtype)],      # fused ±x acts
        compiler_params=pltpu.CompilerParams(
            dimension_semantics=("parallel",)),
    )(scal, x_row, params["w_in"], params["b_in"], params["w_h"],
      params["b_h"], w_out_col)

    out = out_row.reshape(N, 1)
    return out, ev


# ----------------------------------------------------------------------------
# Deterministic parameter init (PyTorch-Linear-style uniform(+-1/sqrt(fan_in)))
# ----------------------------------------------------------------------------
def init_params(key, neurons, n_hidden_layers):
    H = neurons
    L_layers = n_hidden_layers - 1
    keys = jax.random.split(key, 12)

    def u(k, shape, fan_in):
        bound = 1.0 / math.sqrt(fan_in)
        return jax.random.uniform(k, shape, jnp.float32, -bound, bound)

    params = {
        "ev_w": u(keys[0], (1, 1), 1),             # ev_in: Linear(1, 1)
        "ev_b": u(keys[1], (1,), 1),
        "sym_w": u(keys[2], (1, 1), 1),            # symmetry_neuron: Linear(1, 1)
        "sym_b": u(keys[3], (1,), 1),
        "w_in": u(keys[4], (H, 1), 1),             # input_layer: Linear(1, H) (out,in)
        "b_in": u(keys[5], (H, 1), 1),
        "w_h": u(keys[6], (L_layers, H, H), H),    # hidden Linear(H, H), (out,in)
        "b_h": u(keys[7], (L_layers, H, 1), H),
        "w_out_row": u(keys[8], (1, H), H),        # output: Linear(H, 1), (out,in)
        "b_out": u(keys[9], (1, 1), H),
    }
    return params


# Pure-JAX f32 reference (mirrors the PyTorch forward) for a correctness check.
def reference_forward(x, params, *, n_hidden_layers, domain_extrema, symmetry):
    xL, xR = domain_extrema
    Ldom = xR - xL
    switch_val = jax.nn.sigmoid(params["sym_w"][0, 0] + params["sym_b"][0])
    switch = jnp.logical_or(switch_val >= 0.5, jnp.asarray(bool(symmetry)))
    ev = jnp.full_like(x, params["ev_w"][0, 0] + params["ev_b"][0])

    def branch(xin):
        h = jnp.tanh(xin @ params["w_in"].T + params["b_in"].T)          # (N, H)
        for k in range(n_hidden_layers - 1):
            h = jnp.tanh(h @ params["w_h"][k].T + params["b_h"][k].T)    # (N, H)
        return jnp.tanh(h @ params["w_out_row"].T + params["b_out"])     # (N, 1)

    x_out = branch(x)
    x_neg_out = branch(-x)
    out = jnp.where(switch, x_out + x_neg_out, x_out - x_neg_out)
    out = jnp.cos(math.pi / Ldom * x) * out
    return out, ev


if __name__ == "__main__":
    # Small, module-consistent shapes: N=256 collocation points, input_dim=1,
    # neurons=32, n_hidden_layers=3 (i.e. 2 layers in the ModuleList).
    N = 256
    NEURONS = 32
    N_HIDDEN_LAYERS = 3
    DOMAIN = (-1.0, 1.0)
    SYMMETRY = False

    key = jax.random.PRNGKey(0)
    k_x, k_p = jax.random.split(key)
    params = init_params(k_p, NEURONS, N_HIDDEN_LAYERS)
    input_pts = jax.random.uniform(k_x, (N, 1), jnp.float32,
                                   DOMAIN[0], DOMAIN[1])

    out, ev = symmetry_switch_net_forward(
        input_pts, params,
        n_hidden_layers=N_HIDDEN_LAYERS,
        domain_extrema=DOMAIN,
        symmetry=SYMMETRY,
        tile_n=128)   # grid=(2,) -> keeps both TensorCores busy on v7x
    jax.block_until_ready((out, ev))

    out_ref, ev_ref = reference_forward(
        input_pts, params,
        n_hidden_layers=N_HIDDEN_LAYERS,
        domain_extrema=DOMAIN,
        symmetry=SYMMETRY)

    assert out.shape == (N, 1) and ev.shape == (N, 1)
    # bf16 MXU operands (all chips) + bf16 resident activations (v6e/v7x) bound
    # the error vs. the pure-f32 reference; per the perf review the old 1e-5
    # tolerance is loosened accordingly.
    max_err = float(jnp.max(jnp.abs(out - out_ref)))
    assert jnp.allclose(out, out_ref, atol=3e-2, rtol=3e-2), f"max_err={max_err}"
    assert jnp.allclose(ev, ev_ref, atol=1e-6, rtol=1e-6)
    print("KERNEL_OK")
</pallas_src>

<mosaic_0001>
module attributes {stable_mosaic.version = 11 : i64} {
  func.func @_symmetry_net_kernel(%arg0: i32, %arg1: memref<2xf32, #tpu.memory_space<smem>>, %arg2: memref<1x128xf32, #tpu.memory_space<vmem>>, %arg3: memref<32x1xf32, #tpu.memory_space<vmem>>, %arg4: memref<32x1xf32, #tpu.memory_space<vmem>>, %arg5: memref<2x32x32xf32, #tpu.memory_space<vmem>>, %arg6: memref<2x32x1xf32, #tpu.memory_space<vmem>>, %arg7: memref<32x1xf32, #tpu.memory_space<vmem>>, %arg8: memref<1x128xf32, #tpu.memory_space<vmem>>, %arg9: memref<32x256xbf16, #tpu.memory_space<vmem>>) attributes {dimension_semantics = [#tpu.dimension_semantics<parallel>], iteration_bounds = array<i64: 2>, scalar_prefetch = 0 : i64, scratch_operands = 1 : i64, tpu.core_type = #tpu.core_type<tc>, window_params = [{transform_indices = @transform_0, window_bounds = array<i64: 2>}, {transform_indices = @transform_1, window_bounds = array<i64: 1, 128>}, {pipeline_mode = #tpu.pipeline_mode<synchronous>, transform_indices = @transform_2, window_bounds = array<i64: 32, 1>}, {pipeline_mode = #tpu.pipeline_mode<synchronous>, transform_indices = @transform_3, window_bounds = array<i64: 32, 1>}, {pipeline_mode = #tpu.pipeline_mode<synchronous>, transform_indices = @transform_4, window_bounds = array<i64: 2, 32, 32>}, {pipeline_mode = #tpu.pipeline_mode<synchronous>, transform_indices = @transform_5, window_bounds = array<i64: 2, 32, 1>}, {pipeline_mode = #tpu.pipeline_mode<synchronous>, transform_indices = @transform_6, window_bounds = array<i64: 32, 1>}, {transform_indices = @transform_7, window_bounds = array<i64: 1, 128>}]} {
    %c0 = arith.constant 0 : index
    %c0_0 = arith.constant 0 : index
    %0 = vector.load %arg2[%c0, %c0_0] : memref<1x128xf32, #tpu.memory_space<vmem>>, vector<1x128xf32>
    %c0_1 = arith.constant 0 : index
    %1 = memref.load %arg1[%c0_1] : memref<2xf32, #tpu.memory_space<smem>>
    %c1 = arith.constant 1 : index
    %2 = memref.load %arg1[%c1] : memref<2xf32, #tpu.memory_space<smem>>
    %c0_2 = arith.constant 0 : index
    %c0_3 = arith.constant 0 : index
    %3 = vector.load %arg3[%c0_2, %c0_3] : memref<32x1xf32, #tpu.memory_space<vmem>>, vector<32x1xf32>
    %c0_4 = arith.constant 0 : index
    %c0_5 = arith.constant 0 : index
    %4 = vector.load %arg4[%c0_4, %c0_5] : memref<32x1xf32, #tpu.memory_space<vmem>>, vector<32x1xf32>
    %5 = vector.broadcast %3 : vector<32x1xf32> to vector<32x128xf32>
    %6 = vector.broadcast %0 : vector<1x128xf32> to vector<32x128xf32>
    %7 = arith.mulf %5, %6 : vector<32x128xf32>
    %8 = vector.broadcast %4 : vector<32x1xf32> to vector<32x128xf32>
    %9 = arith.addf %7, %8 : vector<32x128xf32>
    %10 = math.tanh %9 : vector<32x128xf32>
    %11 = arith.truncf %10 : vector<32x128xf32> to vector<32x128xbf16>
    %c0_6 = arith.constant 0 : index
    %c0_7 = arith.constant 0 : index
    %12 = vector.load %arg9[%c0_6, %c0_7] : memref<32x256xbf16, #tpu.memory_space<vmem>>, vector<32x128xbf16>
    tpu.vector_store %arg9[%c0_6, %c0_7], %11 {strides = array<i32>} : memref<32x256xbf16, #tpu.memory_space<vmem>>, vector<32x128xbf16>,
    %13 = vector.broadcast %4 : vector<32x1xf32> to vector<32x128xf32>
    %14 = arith.subf %13, %7 : vector<32x128xf32>
    %15 = math.tanh %14 : vector<32x128xf32>
    %16 = arith.truncf %15 : vector<32x128xf32> to vector<32x128xbf16>
    %c0_8 = arith.constant 0 : index
    %c128 = arith.constant 128 : index
    %17 = vector.load %arg9[%c0_8, %c128] : memref<32x256xbf16, #tpu.memory_space<vmem>>, vector<32x128xbf16>
    tpu.vector_store %arg9[%c0_8, %c128], %16 {strides = array<i32>} : memref<32x256xbf16, #tpu.memory_space<vmem>>, vector<32x128xbf16>,
    %c0_9 = arith.constant 0 : index
    %c0_10 = arith.constant 0 : index
    %18 = vector.load %arg9[%c0_9, %c0_10] : memref<32x256xbf16, #tpu.memory_space<vmem>>, vector<32x256xbf16>
    %c0_11 = arith.constant 0 : index
    %c0_12 = arith.constant 0 : index
    %c0_13 = arith.constant 0 : index
    %19 = vector.load %arg5[%c0_11, %c0_12, %c0_13] : memref<2x32x32xf32, #tpu.memory_space<vmem>>, vector<1x32x32xf32>
    %20 = vector.shape_cast %19 : vector<1x32x32xf32> to vector<32x32xf32>
    %21 = arith.truncf %20 : vector<32x32xf32> to vector<32x32xbf16>
    %c0_14 = arith.constant 0 : index
    %c0_15 = arith.constant 0 : index
    %c0_16 = arith.constant 0 : index
    %22 = vector.load %arg6[%c0_14, %c0_15, %c0_16] : memref<2x32x1xf32, #tpu.memory_space<vmem>>, vector<1x32x1xf32>
    %23 = vector.shape_cast %22 : vector<1x32x1xf32> to vector<32x1xf32>
    %cst = arith.constant dense<0.000000e+00> : vector<32x256xf32>
    %24 = tpu.matmul %21, %18, %cst {dimension_numbers = #tpu.dot_dimension_numbers<[1], [0], [0], [1], [0, 0, 1, 1], [], []>} : vector<32x32xbf16>, vector<32x256xbf16>, vector<32x256xf32> -> vector<32x256xf32>
    %25 = vector.broadcast %23 : vector<32x1xf32> to vector<32x256xf32>
    %26 = arith.addf %24, %25 : vector<32x256xf32>
    %27 = math.tanh %26 : vector<32x256xf32>
    %28 = arith.truncf %27 : vector<32x256xf32> to vector<32x256xbf16>
    %c1_17 = arith.constant 1 : index
    %c0_18 = arith.constant 0 : index
    %c0_19 = arith.constant 0 : index
    %29 = vector.load %arg5[%c1_17, %c0_18, %c0_19] : memref<2x32x32xf32, #tpu.memory_space<vmem>>, vector<1x32x32xf32>
    %30 = vector.shape_cast %29 : vector<1x32x32xf32> to vector<32x32xf32>
    %31 = arith.truncf %30 : vector<32x32xf32> to vector<32x32xbf16>
    %c1_20 = arith.constant 1 : index
    %c0_21 = arith.constant 0 : index
    %c0_22 = arith.constant 0 : index
    %32 = vector.load %arg6[%c1_20, %c0_21, %c0_22] : memref<2x32x1xf32, #tpu.memory_space<vmem>>, vector<1x32x1xf32>
    %33 = vector.shape_cast %32 : vector<1x32x1xf32> to vector<32x1xf32>
    %cst_23 = arith.constant dense<0.000000e+00> : vector<32x256xf32>
    %34 = tpu.matmul %31, %28, %cst_23 {dimension_numbers = #tpu.dot_dimension_numbers<[1], [0], [0], [1], [0, 0, 1, 1], [], []>} : vector<32x32xbf16>, vector<32x256xbf16>, vector<32x256xf32> -> vector<32x256xf32>
    %35 = vector.broadcast %33 : vector<32x1xf32> to vector<32x256xf32>
    %36 = arith.addf %34, %35 : vector<32x256xf32>
    %37 = math.tanh %36 : vector<32x256xf32>
    %38 = arith.truncf %37 : vector<32x256xf32> to vector<32x256xbf16>
    %c0_24 = arith.constant 0 : index
    %c0_25 = arith.constant 0 : index
    %39 = vector.load %arg7[%c0_24, %c0_25] : memref<32x1xf32, #tpu.memory_space<vmem>>, vector<32x1xf32>
    %40 = arith.extf %38 : vector<32x256xbf16> to vector<32x256xf32>
    %41 = vector.broadcast %39 : vector<32x1xf32> to vector<32x256xf32>
    %42 = arith.mulf %41, %40 : vector<32x256xf32>
    %cst_26 = arith.constant dense<0.000000e+00> : vector<256xf32>
    %43 = vector.multi_reduction <add>, %42, %cst_26 [0] : vector<32x256xf32> to vector<256xf32>
    %44 = vector.shape_cast %43 : vector<256xf32> to vector<1x256xf32>
    %45 = vector.broadcast %2 : f32 to vector<1x256xf32>
    %46 = arith.addf %44, %45 : vector<1x256xf32>
    %47 = math.tanh %46 : vector<1x256xf32>
    %48 = vector.extract_strided_slice %47 {offsets = [0, 0], sizes = [1, 128], strides = [1, 1]} : vector<1x256xf32> to vector<1x128xf32>
    %49 = vector.extract_strided_slice %47 {offsets = [0, 128], sizes = [1, 128], strides = [1, 1]} : vector<1x256xf32> to vector<1x128xf32>
    %50 = vector.broadcast %1 : f32 to vector<1x128xf32>
    %51 = arith.mulf %50, %49 : vector<1x128xf32>
    %52 = arith.addf %48, %51 : vector<1x128xf32>
    %cst_27 = arith.constant 1.57079637 : f32
    %53 = vector.broadcast %cst_27 : f32 to vector<1x128xf32>
    %54 = arith.mulf %53, %0 : vector<1x128xf32>
    %55 = math.cos %54 : vector<1x128xf32>
    %56 = arith.mulf %55, %52 : vector<1x128xf32>
    %c0_28 = arith.constant 0 : index
    %c0_29 = arith.constant 0 : index
    %57 = vector.load %arg8[%c0_28, %c0_29] : memref<1x128xf32, #tpu.memory_space<vmem>>, vector<1x128xf32>
    tpu.vector_store %arg8[%c0_28, %c0_29], %56 {strides = array<i32>} : memref<1x128xf32, #tpu.memory_space<vmem>>, vector<1x128xf32>,
    return
  }
  func.func @transform_0(%arg0: i32) -> i32 {
    %c0_i32 = arith.constant 0 : i32
    %c0_i32_0 = arith.constant 0 : i32
    return %c0_i32 : i32
  }
  func.func @transform_1(%arg0: i32) -> (i32, i32) {
    %c0_i32 = arith.constant 0 : i32
    %c0_i32_0 = arith.constant 0 : i32
    return %c0_i32, %arg0 : i32, i32
  }
  func.func @transform_2(%arg0: i32) -> (i32, i32) {
    %c0_i32 = arith.constant 0 : i32
    %c0_i32_0 = arith.constant 0 : i32
    %c0_i32_1 = arith.constant 0 : i32
    return %c0_i32, %c0_i32_0 : i32, i32
  }
  func.func @transform_3(%arg0: i32) -> (i32, i32) {
    %c0_i32 = arith.constant 0 : i32
    %c0_i32_0 = arith.constant 0 : i32
    %c0_i32_1 = arith.constant 0 : i32
    return %c0_i32, %c0_i32_0 : i32, i32
  }
  func.func @transform_4(%arg0: i32) -> (i32, i32, i32) {
    %c0_i32 = arith.constant 0 : i32
    %c0_i32_0 = arith.constant 0 : i32
    %c0_i32_1 = arith.constant 0 : i32
    %c0_i32_2 = arith.constant 0 : i32
    return %c0_i32, %c0_i32_0, %c0_i32_1 : i32, i32, i32
  }
  func.func @transform_5(%arg0: i32) -> (i32, i32, i32) {
    %c0_i32 = arith.constant 0 : i32
    %c0_i32_0 = arith.constant 0 : i32
    %c0_i32_1 = arith.constant 0 : i32
    %c0_i32_2 = arith.constant 0 : i32
    return %c0_i32, %c0_i32_0, %c0_i32_1 : i32, i32, i32
  }
  func.func @transform_6(%arg0: i32) -> (i32, i32) {
    %c0_i32 = arith.constant 0 : i32
    %c0_i32_0 = arith.constant 0 : i32
    %c0_i32_1 = arith.constant 0 : i32
    return %c0_i32, %c0_i32_0 : i32, i32
  }
  func.func @transform_7(%arg0: i32) -> (i32, i32) {
    %c0_i32 = arith.constant 0 : i32
    %c0_i32_0 = arith.constant 0 : i32
    return %c0_i32, %arg0 : i32, i32
  }
}

</mosaic_0001>

<llo_original>
// kernel: tpu_custom_call.1
$region0: #{tpu_custom_call.1}
  #allocation0 [shape = 'u32[]', space=smem, size = 0x4, offset = 0x4, fixed_abs, tag = 'smem constant byte address 0x4 - core index']
  #allocation1 [shape = 'u32[144,128]{1,0:T(1,128)}', space=vmem, size = 0x12000, scoped, tag = 'internal scratch']
  #allocation2 [shape = 'bf16[32,256]{1,0:T(16,128)(2,1)}', space=vmem, size = 0x4000, scoped, tag = 'scratch operand']
  %s0 = inlined_call_operand.vmem [shape: f32[2], index: 0, kind: input, shape index: {}]
  %s1 = inlined_call_operand.vmem [shape: f32[1,256], index: 1, kind: input, shape index: {}]
  %s2 = inlined_call_operand.vmem [shape: f32[32,1], index: 2, kind: input, shape index: {}]
  %s3 = inlined_call_operand.vmem [shape: f32[32,1], index: 3, kind: input, shape index: {}]
  %s4 = inlined_call_operand.vmem [shape: f32[2,32,32], index: 4, kind: input, shape index: {}]
  %s5 = inlined_call_operand.vmem [shape: f32[2,32,1], index: 5, kind: input, shape index: {}]
  %s6 = inlined_call_operand.vmem [shape: f32[32,1], index: 6, kind: input, shape index: {}]
  %s7 = inlined_call_operand.hbm [shape: f32[1,256], index: 7, kind: output, shape index: {}]
  %s8 = sld [smem:[#allocation0]]
  $region65: #{tpu_custom_call.1} parent=0
    _
  %s10 = ssub.s32 1, %s8
  %s11 = scalar_select 0, %s10, %s8
  $region1: #{tpu_custom_call.1} parent=0
    #allocation3 [shape = 'u8[512]{0}', space=smem, size = 0x200, scoped, tag = 'input window, operand 0, single buffered']
    #allocation4 [shape = 's32[2]{0}', space=sflag, size = 0x8, scoped, tag = 'scoped memory for tpu_custom_call.1']
    #allocation5 [shape = 's32[2]{0}', space=sflag, size = 0x8, scoped, tag = 'scoped memory for tpu_custom_call.1']
    #allocation6 [shape = 'u8[1024]{0}', space=vmem, size = 0x400, scoped, tag = 'output window, operand 0']
    %12 = vsyncpa [#allocation5], 0
    %13 = vsyncpa [#allocation4], 0
    %s14 = scalar_lea.sflag [#allocation4], 1
    %15 = vsyncpa %s14, 0
    loop: start=0, step=1, limit=4
    $region2: #{tpu_custom_call.1} parent=1 // loop_pre_header
      _
    $region3: #{tpu_custom_call.1} parent=1 // loop_header
      %s17 = sphi 0, %s21
      %p18 = scmp.ge.s32.totalorder %s17, 4
      %s25 = sphi 0, %s25
      %s27 = sphi 0, %s25
      %s28 = sphi 0, %s27
      %s42 = sphi 0, %s28
      %s48 = sphi 0, %s50
      %s51 = sphi 0, %s48
      %s52 = sphi 0, %s51
      %s68 = sphi 0, %s52
      %s72 = sphi 0, %s72
      %s74 = sphi 0, %s72
      %s75 = sphi 0, %s74
      %s89 = sphi 0, %s75
      %s93 = sphi 0, %s93
      %s95 = sphi 0, %s93
      %s96 = sphi 0, %s95
      %s110 = sphi 0, %s96
      %s114 = sphi 0, %s114
      %s116 = sphi 0, %s114
      %s117 = sphi 0, %s116
      %s131 = sphi 0, %s117
      %s135 = sphi 0, %s135
      %s137 = sphi 0, %s135
      %s138 = sphi 0, %s137
      %s152 = sphi 0, %s138
      %s156 = sphi 0, %s156
      %s158 = sphi 0, %s156
      %s159 = sphi 0, %s158
      %s173 = sphi 0, %s159
      %s179 = sphi 0, %s181
      %s182 = sphi 0, %s179
      %s183 = sphi 0, %s182
      %s199 = sphi 0, %s183
    $region4: #{tpu_custom_call.1} parent=1 // loop_header_branch
      %20 = sbr.rel (%p18) target = $region8
    $region5: #{tpu_custom_call.1} parent=1 // loop_body
      %s22 = ssub.s32 %s17, 1
      %s23 = ssub.s32 %s17, 2
      %s24 = sadd.s32 %s17, 1
      %s26 = sadd.s32 %s25, 1
      %p29 = scmp.eq.s32.totalorder %s17, 1
      %p30 = scmp.ne.s32.totalorder %s25, %s27
      %p31 = scmp.eq.s32.totalorder %s17, 0
      %p32 = por %p30, %p31
      %p33 = scmp.ne.s32.totalorder %s25, %s27
      %p34 = scmp.eq.s32.totalorder %s22, 1
      %p35 = por %p33, %p34
      %p36 = scmp.ne.s32.totalorder %s27, %s28
      %p37 = scmp.eq.s32.totalorder %s22, 0
      %p38 = por %p36, %p37
      %p39 = scmp.ne.s32.totalorder %s27, %s28
      %p40 = scmp.eq.s32.totalorder %s23, 1
      %p41 = por %p39, %p40
      %p43 = scmp.ne.s32.totalorder %s28, %s42
      %p44 = scmp.eq.s32.totalorder %s23, 0
      %p45 = por %p43, %p44
      %s46 = ssub.s32 %s17, %s24
      %p47 = scmp.eq.s32.totalorder %s46, 0
      %s49 = sadd.s32 %s48, 1
      %s50 = scalar_select %p47, %s48, %s49
      %p53 = pneg %p47
      %p54 = scmp.eq.s32.totalorder %s17, 1
      %p55 = por %p53, %p54
      %p56 = scmp.ne.s32.totalorder %s48, %s51
      %p57 = scmp.eq.s32.totalorder %s17, 0
      %p58 = por %p56, %p57
      %p59 = scmp.ne.s32.totalorder %s48, %s51
      %p60 = scmp.eq.s32.totalorder %s22, 1
      %p61 = por %p59, %p60
      %p62 = scmp.ne.s32.totalorder %s51, %s52
      %p63 = scmp.eq.s32.totalorder %s22, 0
      %p64 = por %p62, %p63
      %p65 = scmp.ne.s32.totalorder %s51, %s52
      %p66 = scmp.eq.s32.totalorder %s23, 1
      %p67 = por %p65, %p66
      %p69 = scmp.ne.s32.totalorder %s52, %s68
      %p70 = scmp.eq.s32.totalorder %s23, 0
      %p71 = por %p69, %p70
      %s73 = sadd.s32 %s72, 1
      %p76 = scmp.eq.s32.totalorder %s17, 1
      %p77 = scmp.ne.s32.totalorder %s72, %s74
      %p78 = scmp.eq.s32.totalorder %s17, 0
      %p79 = por %p77, %p78
      %p80 = scmp.ne.s32.totalorder %s72, %s74
      %p81 = scmp.eq.s32.totalorder %s22, 1
      %p82 = por %p80, %p81
      %p83 = scmp.ne.s32.totalorder %s74, %s75
      %p84 = scmp.eq.s32.totalorder %s22, 0
      %p85 = por %p83, %p84
      %p86 = scmp.ne.s32.totalorder %s74, %s75
      %p87 = scmp.eq.s32.totalorder %s23, 1
      %p88 = por %p86, %p87
      %p90 = scmp.ne.s32.totalorder %s75, %s89
      %p91 = scmp.eq.s32.totalorder %s23, 0
      %p92 = por %p90, %p91
      %s94 = sadd.s32 %s93, 1
      %p97 = scmp.eq.s32.totalorder %s17, 1
      %p98 = scmp.ne.s32.totalorder %s93, %s95
      %p99 = scmp.eq.s32.totalorder %s17, 0
      %p100 = por %p98, %p99
      %p101 = scmp.ne.s32.totalorder %s93, %s95
      %p102 = scmp.eq.s32.totalorder %s22, 1
      %p103 = por %p101, %p102
      %p104 = scmp.ne.s32.totalorder %s95, %s96
      %p105 = scmp.eq.s32.totalorder %s22, 0
      %p106 = por %p104, %p105
      %p107 = scmp.ne.s32.totalorder %s95, %s96
      %p108 = scmp.eq.s32.totalorder %s23, 1
      %p109 = por %p107, %p108
      %p111 = scmp.ne.s32.totalorder %s96, %s110
      %p112 = scmp.eq.s32.totalorder %s23, 0
      %p113 = por %p111, %p112
      %s115 = sadd.s32 %s114, 1
      %p118 = scmp.eq.s32.totalorder %s17, 1
      %p119 = scmp.ne.s32.totalorder %s114, %s116
      %p120 = scmp.eq.s32.totalorder %s17, 0
      %p121 = por %p119, %p120
      %p122 = scmp.ne.s32.totalorder %s114, %s116
      %p123 = scmp.eq.s32.totalorder %s22, 1
      %p124 = por %p122, %p123
      %p125 = scmp.ne.s32.totalorder %s116, %s117
      %p126 = scmp.eq.s32.totalorder %s22, 0
      %p127 = por %p125, %p126
      %p128 = scmp.ne.s32.totalorder %s116, %s117
      %p129 = scmp.eq.s32.totalorder %s23, 1
      %p130 = por %p128, %p129
      %p132 = scmp.ne.s32.totalorder %s117, %s131
      %p133 = scmp.eq.s32.totalorder %s23, 0
      %p134 = por %p132, %p133
      %s136 = sadd.s32 %s135, 1
      %p139 = scmp.eq.s32.totalorder %s17, 1
      %p140 = scmp.ne.s32.totalorder %s135, %s137
      %p141 = scmp.eq.s32.totalorder %s17, 0
      %p142 = por %p140, %p141
      %p143 = scmp.ne.s32.totalorder %s135, %s137
      %p144 = scmp.eq.s32.totalorder %s22, 1
      %p145 = por %p143, %p144
      %p146 = scmp.ne.s32.totalorder %s137, %s138
      %p147 = scmp.eq.s32.totalorder %s22, 0
      %p148 = por %p146, %p147
      %p149 = scmp.ne.s32.totalorder %s137, %s138
      %p150 = scmp.eq.s32.totalorder %s23, 1
      %p151 = por %p149, %p150
      %p153 = scmp.ne.s32.totalorder %s138, %s152
      %p154 = scmp.eq.s32.totalorder %s23, 0
      %p155 = por %p153, %p154
      %s157 = sadd.s32 %s156, 1
      %p160 = scmp.eq.s32.totalorder %s17, 1
      %p161 = scmp.ne.s32.totalorder %s156, %s158
      %p162 = scmp.eq.s32.totalorder %s17, 0
      %p163 = por %p161, %p162
      %p164 = scmp.ne.s32.totalorder %s156, %s158
      %p165 = scmp.eq.s32.totalorder %s22, 1
      %p166 = por %p164, %p165
      %p167 = scmp.ne.s32.totalorder %s158, %s159
      %p168 = scmp.eq.s32.totalorder %s22, 0
      %p169 = por %p167, %p168
      %p170 = scmp.ne.s32.totalorder %s158, %s159
      %p171 = scmp.eq.s32.totalorder %s23, 1
      %p172 = por %p170, %p171
      %p174 = scmp.ne.s32.totalorder %s159, %s173
      %p175 = scmp.eq.s32.totalorder %s23, 0
      %p176 = por %p174, %p175
      %s177 = ssub.s32 %s17, %s24
      %p178 = scmp.eq.s32.totalorder %s177, 0
      %s180 = sadd.s32 %s179, 1
      %s181 = scalar_select %p178, %s179, %s180
      %p184 = pneg %p178
      %p185 = scmp.eq.s32.totalorder %s17, 1
      %p186 = por %p184, %p185
      %p187 = scmp.ne.s32.totalorder %s179, %s182
      %p188 = scmp.eq.s32.totalorder %s17, 0
      %p189 = por %p187, %p188
      %p190 = scmp.ne.s32.totalorder %s179, %s182
      %p191 = scmp.eq.s32.totalorder %s22, 1
      %p192 = por %p190, %p191
      %p193 = scmp.ne.s32.totalorder %s182, %s183
      %p194 = scmp.eq.s32.totalorder %s22, 0
      %p195 = por %p193, %p194
      %p196 = scmp.ne.s32.totalorder %s182, %s183
      %p197 = scmp.eq.s32.totalorder %s23, 1
      %p198 = por %p196, %p197
      %p200 = scmp.ne.s32.totalorder %s183, %s199
      %p201 = scmp.eq.s32.totalorder %s23, 0
      %p202 = por %p200, %p201
      %p203 = scmp.le.s32.totalorder 1, %s17
      %p204 = scmp.lt.s32.totalorder %s17, 3
      %p205 = pnand %p203, %p204
      %p206 = pneg %p205
      // Predicated region
      $region9: #{tpu_custom_call.1} parent=5 // pred_check
        _
      $region10: #{tpu_custom_call.1} parent=5 // pred_check_branch
        %208 = sbr.rel (%p205) target = $region12
      $region11: #{tpu_custom_call.1} parent=5 // pred_region
        %s209 = ssub.s32 %s17, 1
        // Predicated region
        $region13: #{tpu_custom_call.1} parent=11 // pred_check
          %p210 = pneg %p38
        $region14: #{tpu_custom_call.1} parent=11 // pred_check_branch
          %212 = sbr.rel (%p210) target = $region16
        $region15: #{tpu_custom_call.1} parent=11 // pred_region
          %s214 = ssub.s32 16, 16
          %215 = vsyncadd [#allocation5], %s214
          %s217 = sshll.u32 %s0, 4
          %s218 = int_to_ptr.vmem [resolvable:$true] %s217
          %220 = dma.vmem_to_smem %s218, 16, [#allocation3], [#allocation5]
        $region16: #{tpu_custom_call.1} parent=11 // pred_fallthru
          _
        // Predicated region
        $region17: #{tpu_custom_call.1} parent=11 // pred_check
          %p221 = pneg %p85
        $region18: #{tpu_custom_call.1} parent=11 // pred_check_branch
          %223 = sbr.rel (%p221) target = $region20
        $region19: #{tpu_custom_call.1} parent=11 // pred_region
          _
        $region20: #{tpu_custom_call.1} parent=11 // pred_fallthru
          _
        // Predicated region
        $region21: #{tpu_custom_call.1} parent=11 // pred_check
          %p224 = pneg %p106
        $region22: #{tpu_custom_call.1} parent=11 // pred_check_branch
          %226 = sbr.rel (%p224) target = $region24
        $region23: #{tpu_custom_call.1} parent=11 // pred_region
          _
        $region24: #{tpu_custom_call.1} parent=11 // pred_fallthru
          _
        // Predicated region
        $region25: #{tpu_custom_call.1} parent=11 // pred_check
          %p227 = pneg %p127
        $region26: #{tpu_custom_call.1} parent=11 // pred_check_branch
          %229 = sbr.rel (%p227) target = $region28
        $region27: #{tpu_custom_call.1} parent=11 // pred_region
          _
        $region28: #{tpu_custom_call.1} parent=11 // pred_fallthru
          _
        // Predicated region
        $region29: #{tpu_custom_call.1} parent=11 // pred_check
          %p230 = pneg %p148
        $region30: #{tpu_custom_call.1} parent=11 // pred_check_branch
          %232 = sbr.rel (%p230) target = $region32
        $region31: #{tpu_custom_call.1} parent=11 // pred_region
          _
        $region32: #{tpu_custom_call.1} parent=11 // pred_fallthru
          _
        // Predicated region
        $region33: #{tpu_custom_call.1} parent=11 // pred_check
          %p233 = pneg %p169
        $region34: #{tpu_custom_call.1} parent=11 // pred_check_branch
          %235 = sbr.rel (%p233) target = $region36
        $region35: #{tpu_custom_call.1} parent=11 // pred_region
          _
        $region36: #{tpu_custom_call.1} parent=11 // pred_fallthru
          _
      $region12: #{tpu_custom_call.1} parent=5 // pred_fallthru
        _
      %p236 = scmp.lt.s32.totalorder %s17, 2
      // Predicated region
      $region37: #{tpu_custom_call.1} parent=5 // pred_check
        %p237 = pneg %p236
      $region38: #{tpu_custom_call.1} parent=5 // pred_check_branch
        %239 = sbr.rel (%p237) target = $region40
      $region39: #{tpu_custom_call.1} parent=5 // pred_region
        // Predicated region
        $region41: #{tpu_custom_call.1} parent=39 // pred_check
          %p240 = pneg %p58
        $region42: #{tpu_custom_call.1} parent=39 // pred_check_branch
          %242 = sbr.rel (%p240) target = $region44
        $region43: #{tpu_custom_call.1} parent=39 // pred_region
          %p243 = scmp.lt.s32.totalorder %s17, 1
          %s244 = scalar_select %p243, %s17, 1
          %s245 = scalar_lea.vmem %s1, %s244
        $region44: #{tpu_custom_call.1} parent=39 // pred_fallthru
          _
      $region40: #{tpu_custom_call.1} parent=5 // pred_fallthru
        _
      %p246 = scmp.le.s32.totalorder 1, %s17
      %p247 = scmp.lt.s32.totalorder %s17, 3
      %p248 = pnand %p246, %p247
      %p249 = pneg %p248
      // Predicated region
      $region45: #{tpu_custom_call.1} parent=5 // pred_check
        _
      $region46: #{tpu_custom_call.1} parent=5 // pred_check_branch
        %251 = sbr.rel (%p248) target = $region48
      $region47: #{tpu_custom_call.1} parent=5 // pred_region
        %s252 = ssub.s32 %s17, 1
        // Predicated region
        $region49: #{tpu_custom_call.1} parent=47 // pred_check
          %p253 = pneg %p38
        $region50: #{tpu_custom_call.1} parent=47 // pred_check_branch
          %255 = sbr.rel (%p253) target = $region52
        $region51: #{tpu_custom_call.1} parent=47 // pred_region
          %256 = dma.done [#allocation5], 16
        $region52: #{tpu_custom_call.1} parent=47 // pred_fallthru
          _
        %257 = sfence
        %p258 = pneg %p38
        %p259 = pneg %p35
        %p260 = scmp.lt.s32.totalorder %s22, 1
        %s261 = scalar_select %p260, %s22, 1
        %s262 = scalar_lea.vmem %s1, %s261
        %p263 = pneg %p64
        %p264 = pneg %p61
        %p265 = pneg %p85
        %p266 = pneg %p82
        %p267 = pneg %p106
        %p268 = pneg %p103
        %p269 = pneg %p127
        %p270 = pneg %p124
        %p271 = pneg %p148
        %p272 = pneg %p145
        %p273 = pneg %p169
        %p274 = pneg %p166
        %p275 = pneg %p195
        %p276 = pneg %p192
        %s277 = sand.u32 %s182, 1
        %s278 = scalar_lea.sflag [#allocation4], %s277
        %s279 = sand.u32 %s182, 1
        %s280 = scalar_lea.vmem [#allocation6], %s279
        %p281 = scmp.lt.s32.totalorder %s22, 1
        %s282 = scalar_select %p281, %s22, 1
        %s283 = scalar_lea.vmem %s1, %s282
        %v285 = vld [vmem:[%s283] sm:$0x1]
        %s286 = sld [smem:[#allocation3]]
        %s287 = sld [smem:[#allocation3 + $0x1]]
        %v288 = vld [vmem:[%s2] sm:$0xff]
        %v289 = vld [vmem:[%s2 + $0x8] sm:$0xff]
        %v290 = vld [vmem:[%s2 + $0x10] sm:$0xff]
        %v291 = vld [vmem:[%s2 + $0x18] sm:$0xff]
        %v292 = vld [vmem:[%s3] sm:$0xff]
        %v293 = vld [vmem:[%s3 + $0x8] sm:$0xff]
        %v294 = vld [vmem:[%s3 + $0x10] sm:$0xff]
        %v295 = vld [vmem:[%s3 + $0x18] sm:$0xff]
        %297 = vset.pattern.permute.xlu0 0
        %298 = vperm.xlu0 %297, %v288
        %v299 = vpop.permute.xlu0 %298
        %302 = vset.pattern.permute.xlu0 0
        %303 = vperm.xlu0 %302, %v289
        %v304 = vpop.permute.xlu0 %303
        %307 = vset.pattern.permute.xlu0 0
        %308 = vperm.xlu0 %307, %v290
        %v309 = vpop.permute.xlu0 %308
        %312 = vset.pattern.permute.xlu0 0
        %313 = vperm.xlu0 %312, %v291
        %v314 = vpop.permute.xlu0 %313
        %v317 = vlaneseq
        %v318 = vshrl.u32 %v317, 7
        %v319 = vsub.s32 0, %v318
        %v320 = vrot.slane %v285, %v319
        %v322 = vmul.f32 %v299, %v320
        %v323 = vmul.f32 %v304, %v320
        %v324 = vmul.f32 %v309, %v320
        %v325 = vmul.f32 %v314, %v320
        %327 = vset.pattern.permute.xlu0 0
        %328 = vperm.xlu0 %327, %v292
        %v329 = vpop.permute.xlu0 %328
        %332 = vset.pattern.permute.xlu0 0
        %333 = vperm.xlu0 %332, %v293
        %v334 = vpop.permute.xlu0 %333
        %337 = vset.pattern.permute.xlu0 0
        %338 = vperm.xlu0 %337, %v294
        %v339 = vpop.permute.xlu0 %338
        %342 = vset.pattern.permute.xlu0 0
        %343 = vperm.xlu0 %342, %v295
        %v344 = vpop.permute.xlu0 %343
        %v346 = vadd.f32 %v322, %v329
        %v347 = vadd.f32 %v323, %v334
        %v348 = vadd.f32 %v324, %v339
        %v349 = vadd.f32 %v325, %v344
        %v350 = vtanh.pop %v346
        %v351 = vtanh.pop %v347
        %v352 = vtanh.pop %v348
        %v353 = vtanh.pop %v349
        %v354 = vpack.c.bf16 %v351, %v350
        %v355 = vpack.c.bf16 %v353, %v352
        %356 = vst [vmem:[#allocation2] sm:$0xff] %v354
        %357 = vst [vmem:[#allocation2 + $0x10] sm:$0xff] %v355
        %v358 = vsub.f32 %v329, %v322
        %v359 = vsub.f32 %v334, %v323
        %v360 = vsub.f32 %v339, %v324
        %v361 = vsub.f32 %v344, %v325
        %v362 = vtanh.pop %v358
        %v363 = vtanh.pop %v359
        %v364 = vtanh.pop %v360
        %v365 = vtanh.pop %v361
        %v366 = vpack.c.bf16 %v363, %v362
        %v367 = vpack.c.bf16 %v365, %v364
        %368 = vst [vmem:[#allocation2 + $0x8] sm:$0xff] %v366
        %369 = vst [vmem:[#allocation2 + $0x18] sm:$0xff] %v367
        %v370 = vld [vmem:[#allocation2] sm:$0xff]
        %v371 = vld [vmem:[#allocation2 + $0x8] sm:$0xff]
        %v372 = vld [vmem:[#allocation2 + $0x10] sm:$0xff]
        %v373 = vld [vmem:[#allocation2 + $0x18] sm:$0xff]
        %v374 = vld [vmem:[%s4] sm:$0xff]
        %v375 = vld [vmem:[%s4 + $0x8] sm:$0xff]
        %v376 = vld [vmem:[%s4 + $0x10] sm:$0xff]
        %v377 = vld [vmem:[%s4 + $0x18] sm:$0xff]
        %v378 = vpack.c.bf16 %v375, %v374
        %v379 = vpack.c.bf16 %v377, %v376
        %v380 = vld [vmem:[%s5] sm:$0xff]
        %v381 = vld [vmem:[%s5 + $0x8] sm:$0xff]
        %v382 = vld [vmem:[%s5 + $0x10] sm:$0xff]
        %v383 = vld [vmem:[%s5 + $0x18] sm:$0xff]
        %385 = vset.pattern.permute.xlu0 0
        %386 = vperm.xlu0 %385, %v380
        %v387 = vpop.permute.xlu0 %386
        %390 = vset.pattern.permute.xlu0 0
        %391 = vperm.xlu0 %390, %v381
        %v392 = vpop.permute.xlu0 %391
        %395 = vset.pattern.permute.xlu0 0
        %396 = vperm.xlu0 %395, %v382
        %v397 = vpop.permute.xlu0 %396
        %400 = vset.pattern.permute.xlu0 0
        %401 = vperm.xlu0 %400, %v383
        %v402 = vpop.permute.xlu0 %401
        %vm404 = vcmask 261120
        %v406 = vsel %vm404, %v378, 0
        %v409 = vsel %vm404, %v379, 0
        %411 = vmatprep.subr.bf16.mxu0 %v371
        %412 = vmatpush1.bf16.msra.mxu0 %v370
        %413 = vmatprep.subr.bf16.mxu0 %v373
        %414 = vmatpush1.bf16.msra.mxu0 %v372
        %415 = vmatprep.subr.bf16.mxu0 0
        %416 = vmatpush1.bf16.msra.mxu0 0
        %417 = vmatprep.subr.bf16.mxu0 0
        %418 = vmatpush1.bf16.msra.mxu0 0
        %419 = vmatprep.subr.bf16.mxu0 0
        %420 = vmatpush1.bf16.msra.mxu0 0
        %421 = vmatprep.subr.bf16.mxu0 0
        %422 = vmatpush1.bf16.msra.mxu0 0
        %423 = vmatprep.subr.bf16.mxu0 0
        %424 = vmatpush1.bf16.msra.mxu0 0
        %425 = vmatprep.subr.bf16.mxu0 0
        %426 = vmatpush1.bf16.msra.mxu0 0
        %427 = vmatprep.subr.bf16.mxu0 0
        %428 = vmatpush1.bf16.msra.mxu0 0
        %429 = vmatprep.subr.bf16.mxu0 0
        %430 = vmatpush1.bf16.msra.mxu0 0
        %431 = vmatprep.subr.bf16.mxu0 0
        %432 = vmatpush1.bf16.msra.mxu0 0
        %433 = vmatprep.subr.bf16.mxu0 0
        %434 = vmatpush1.bf16.msra.mxu0 0
        %435 = vmatprep.subr.bf16.mxu0 0
        %436 = vmatpush1.bf16.msra.mxu0 0
        %437 = vmatprep.subr.bf16.mxu0 0
        %438 = vmatpush1.bf16.msra.mxu0 0
        %439 = vmatprep.subr.bf16.mxu0 0
        %440 = vmatpush1.bf16.msra.mxu0 0
        %441 = vmatprep.subr.bf16.mxu0 0
        %442 = vmatpush1.bf16.msra.mxu0 0
        %443 = vmatprep.mubr.bf16.mxu0 0
        %444 = vmatmul.mubr.bf16.gmra.mrb[0].mxu0 %v406
        %v445 = vpop.f32.mrb[0].mxu0
        %v446 = vadd.f32 %v387, %v445
        %v447 = vpop.f32.mrb[0].mxu0
        %v448 = vadd.f32 %v387, %v447
        %v449 = vpop.f32.mrb[0].mxu0
        %v450 = vadd.f32 %v392, %v449
        %v451 = vpop.f32.mrb[0].mxu0
        %v452 = vadd.f32 %v392, %v451
        %453 = vmatprep.mubr.bf16.mxu0 0
        %454 = vmatmul.mubr.bf16.gmra.mrb[0].mxu0 %v409
        %v455 = vpop.f32.mrb[0].mxu0
        %v456 = vadd.f32 %v397, %v455
        %v457 = vpop.f32.mrb[0].mxu0
        %v458 = vadd.f32 %v397, %v457
        %v459 = vpop.f32.mrb[0].mxu0
        %v460 = vadd.f32 %v402, %v459
        %v461 = vpop.f32.mrb[0].mxu0
        %v462 = vadd.f32 %v402, %v461
        %463 = vdwg.mxu0
        %v464 = vtanh.pop %v446
        %v465 = vtanh.pop %v448
        %v466 = vtanh.pop %v450
        %v467 = vtanh.pop %v452
        %v468 = vtanh.pop %v456
        %v469 = vtanh.pop %v458
        %v470 = vtanh.pop %v460
        %v471 = vtanh.pop %v462
        %v472 = vpack.c.bf16 %v466, %v464
        %v473 = vpack.c.bf16 %v467, %v465
        %v474 = vpack.c.bf16 %v470, %v468
        %v475 = vpack.c.bf16 %v471, %v469
        %s476 = scalar_lea.vmem %s4, 32
        %v477 = vld [vmem:[%s476] sm:$0xff]
        %v478 = vld [vmem:[%s476 + $0x8] sm:$0xff]
        %v479 = vld [vmem:[%s476 + $0x10] sm:$0xff]
        %v480 = vld [vmem:[%s476 + $0x18] sm:$0xff]
        %v481 = vpack.c.bf16 %v478, %v477
        %v482 = vpack.c.bf16 %v480, %v479
        %s483 = scalar_lea.vmem %s5, 32
        %v484 = vld [vmem:[%s483] sm:$0xff]
        %v485 = vld [vmem:[%s483 + $0x8] sm:$0xff]
        %v486 = vld [vmem:[%s483 + $0x10] sm:$0xff]
        %v487 = vld [vmem:[%s483 + $0x18] sm:$0xff]
        %489 = vset.pattern.permute.xlu0 0
        %490 = vperm.xlu0 %489, %v484
        %v491 = vpop.permute.xlu0 %490
        %494 = vset.pattern.permute.xlu0 0
        %495 = vperm.xlu0 %494, %v485
        %v496 = vpop.permute.xlu0 %495
        %499 = vset.pattern.permute.xlu0 0
        %500 = vperm.xlu0 %499, %v486
        %v501 = vpop.permute.xlu0 %500
        %504 = vset.pattern.permute.xlu0 0
        %505 = vperm.xlu0 %504, %v487
        %v506 = vpop.permute.xlu0 %505
        %v509 = vsel %vm404, %v481, 0
        %v512 = vsel %vm404, %v482, 0
        %514 = vmatprep.subr.bf16.mxu0 %v473
        %515 = vmatpush1.bf16.msra.mxu0 %v472
        %516 = vmatprep.subr.bf16.mxu0 %v475
        %517 = vmatpush1.bf16.msra.mxu0 %v474
        %518 = vmatprep.subr.bf16.mxu0 0
        %519 = vmatpush1.bf16.msra.mxu0 0
        %520 = vmatprep.subr.bf16.mxu0 0
        %521 = vmatpush1.bf16.msra.mxu0 0
        %522 = vmatprep.subr.bf16.mxu0 0
        %523 = vmatpush1.bf16.msra.mxu0 0
        %524 = vmatprep.subr.bf16.mxu0 0
        %525 = vmatpush1.bf16.msra.mxu0 0
        %526 = vmatprep.subr.bf16.mxu0 0
        %527 = vmatpush1.bf16.msra.mxu0 0
        %528 = vmatprep.subr.bf16.mxu0 0
        %529 = vmatpush1.bf16.msra.mxu0 0
        %530 = vmatprep.subr.bf16.mxu0 0
        %531 = vmatpush1.bf16.msra.mxu0 0
        %532 = vmatprep.subr.bf16.mxu0 0
        %533 = vmatpush1.bf16.msra.mxu0 0
        %534 = vmatprep.subr.bf16.mxu0 0
        %535 = vmatpush1.bf16.msra.mxu0 0
        %536 = vmatprep.subr.bf16.mxu0 0
        %537 = vmatpush1.bf16.msra.mxu0 0
        %538 = vmatprep.subr.bf16.mxu0 0
        %539 = vmatpush1.bf16.msra.mxu0 0
        %540 = vmatprep.subr.bf16.mxu0 0
        %541 = vmatpush1.bf16.msra.mxu0 0
        %542 = vmatprep.subr.bf16.mxu0 0
        %543 = vmatpush1.bf16.msra.mxu0 0
        %544 = vmatprep.subr.bf16.mxu0 0
        %545 = vmatpush1.bf16.msra.mxu0 0
        %546 = vmatprep.mubr.bf16.mxu0 0
        %547 = vmatmul.mubr.bf16.gmra.mrb[0].mxu0 %v509
        %v548 = vpop.f32.mrb[0].mxu0
        %v549 = vadd.f32 %v491, %v548
        %v550 = vpop.f32.mrb[0].mxu0
        %v551 = vadd.f32 %v491, %v550
        %v552 = vpop.f32.mrb[0].mxu0
        %v553 = vadd.f32 %v496, %v552
        %v554 = vpop.f32.mrb[0].mxu0
        %v555 = vadd.f32 %v496, %v554
        %556 = vmatprep.mubr.bf16.mxu0 0
        %557 = vmatmul.mubr.bf16.gmra.mrb[0].mxu0 %v512
        %v558 = vpop.f32.mrb[0].mxu0
        %v559 = vadd.f32 %v501, %v558
        %v560 = vpop.f32.mrb[0].mxu0
        %v561 = vadd.f32 %v501, %v560
        %v562 = vpop.f32.mrb[0].mxu0
        %v563 = vadd.f32 %v506, %v562
        %v564 = vpop.f32.mrb[0].mxu0
        %v565 = vadd.f32 %v506, %v564
        %566 = vdwg.mxu0
        %v567 = vtanh.pop %v549
        %v568 = vtanh.pop %v551
        %v569 = vtanh.pop %v553
        %v570 = vtanh.pop %v555
        %v571 = vtanh.pop %v559
        %v572 = vtanh.pop %v561
        %v573 = vtanh.pop %v563
        %v574 = vtanh.pop %v565
        %v575 = vpack.c.bf16 %v569, %v567
        %v576 = vpack.c.bf16 %v570, %v568
        %v577 = vpack.c.bf16 %v573, %v571
        %v578 = vpack.c.bf16 %v574, %v572
        %v579 = vld [vmem:[%s6] sm:$0xff]
        %v580 = vld [vmem:[%s6 + $0x8] sm:$0xff]
        %v581 = vld [vmem:[%s6 + $0x10] sm:$0xff]
        %v582 = vld [vmem:[%s6 + $0x18] sm:$0xff]
        %v583 = vunpack.c.l.bf16 %v575
        %v584 = vunpack.c.l.bf16 %v576
        %v585 = vunpack.c.h.bf16 %v575
        %v586 = vunpack.c.h.bf16 %v576
        %v587 = vunpack.c.l.bf16 %v577
        %v588 = vunpack.c.l.bf16 %v578
        %v589 = vunpack.c.h.bf16 %v577
        %v590 = vunpack.c.h.bf16 %v578
        %592 = vset.pattern.permute.xlu0 0
        %593 = vperm.xlu0 %592, %v579
        %v594 = vpop.permute.xlu0 %593
        %597 = vset.pattern.permute.xlu0 0
        %598 = vperm.xlu0 %597, %v580
        %v599 = vpop.permute.xlu0 %598
        %602 = vset.pattern.permute.xlu0 0
        %603 = vperm.xlu0 %602, %v581
        %v604 = vpop.permute.xlu0 %603
        %607 = vset.pattern.permute.xlu0 0
        %608 = vperm.xlu0 %607, %v582
        %v609 = vpop.permute.xlu0 %608
        %v611 = vmul.f32 %v594, %v583
        %v612 = vmul.f32 %v594, %v584
        %v613 = vmul.f32 %v599, %v585
        %v614 = vmul.f32 %v599, %v586
        %v615 = vmul.f32 %v604, %v587
        %v616 = vmul.f32 %v604, %v588
        %v617 = vmul.f32 %v609, %v589
        %v618 = vmul.f32 %v609, %v590
        %v619 = vadd.f32 %v611, %v613
        %v620 = vadd.f32 %v619, %v615
        %v621 = vadd.f32 %v620, %v617
        %v622 = vrot.slane %v621, 4
        %v623 = vadd.f32 %v621, %v622
        %v624 = vrot.slane %v623, 2
        %v625 = vadd.f32 %v623, %v624
        %v626 = vrot.slane %v625, 1
        %v627 = vadd.f32 %v625, %v626
        %v628 = vadd.f32 %v612, %v614
        %v629 = vadd.f32 %v628, %v616
        %v630 = vadd.f32 %v629, %v618
        %v631 = vrot.slane %v630, 4
        %v632 = vadd.f32 %v630, %v631
        %v633 = vrot.slane %v632, 2
        %v634 = vadd.f32 %v632, %v633
        %v635 = vrot.slane %v634, 1
        %v636 = vadd.f32 %v634, %v635
        %v637 = vstv %s287
        %v638 = vadd.f32 %v627, %v637
        %v639 = vadd.f32 %v636, %v637
        %v640 = vtanh.pop %v638
        %v641 = vtanh.pop %v639
        %v642 = vstv %s286
        %v643 = vmul.f32 %v642, %v641
        %v644 = vadd.f32 %v640, %v643
        %v645 = vmul.f32 %v285, 1.5707964
        %v646 = vand.u32 2147483647, %v645
        %vm647 = vcmp.le.f32.partialorder %v646, 0.7853982
        %vm648 = vcmp.lt.s32.totalorder %v645, 0
        %v649 = vand.u32 %v645, 2139095040
        %v650 = vshrl.u32 %v649, 23
        %v651 = vsub.s32 %v650, 127
        %v652 = vand.u32 2147483647, %v645
        %v653 = vand.u32 %v652, 8388607
        %v654 = vor.u32 %v653, 8388608
        %v655 = vsub.s32 0, %v654
        %v656 = vadd.s32 %v651, 1
        %vm657 = vcmp.gt.s32.totalorder %v656, 0
        %v658 = vsel %vm657, %v656, 0
        %v659 = vshrl.u32 %v658, 5
        %v660 = vand.u32 %v658, 31
        %v661 = vsub.s32 32, %v660
        %v662 = vshrl.u32 683565275, %v661
        %v663 = vshll.u32 683565275, %v660
        %v664 = vshrl.u32 2475754826, %v661
        %v665 = vor.u32 %v663, %v664
        %v666 = vshll.u32 2475754826, %v660
        %v667 = vshrl.u32 2131351028, %v661
        %v668 = vor.u32 %v666, %v667
        %v669 = vshll.u32 2131351028, %v660
        %v670 = vshrl.u32 2102212464, %v661
        %v671 = vor.u32 %v669, %v670
        %v672 = vshll.u32 2102212464, %v660
        %v673 = vshrl.u32 920167782, %v661
        %v674 = vor.u32 %v672, %v673
        %v675 = vshll.u32 920167782, %v660
        %v676 = vshrl.u32 1326507024, %v661
        %v677 = vor.u32 %v675, %v676
        %vm678 = vcmp.lt.s32.totalorder %v659, 1
        %vm679 = vcmp.lt.s32.totalorder %v659, 2
        %vm680 = vcmp.lt.s32.totalorder %v659, 3
        %vm681 = vcmp.lt.s32.totalorder %v659, 4
        %v682 = vsel %vm678, %v662, %v665
        %v683 = vsel %vm681, %v671, 2102212464
        %v684 = vsel %vm680, %v668, %v683
        %v685 = vsel %vm679, %v682, %v684
        %v686 = vsel %vm678, %v665, %v668
        %v687 = vsel %vm681, %v674, 920167782
        %v688 = vsel %vm680, %v671, %v687
        %v689 = vsel %vm679, %v686, %v688
        %v690 = vsel %vm678, %v668, %v671
        %v691 = vsel %vm681, %v677, 1326507024
        %v692 = vsel %vm680, %v674, %v691
        %v693 = vsel %vm679, %v690, %v692
        %v694 = vshll.u32 %v654, 8
        %v695 = vmul.u32.u64.compose %v694, %v693
        %v696 = vextract.low.u32 %v695
        %v697 = vextract.high.u32 %v695
        %v698 = vmul.u32.u64.compose %v694, %v689
        %v699 = vextract.low.u32 %v698
        %v700 = vextract.high.u32 %v698
        %v701 = vmul.u32 %v694, %v685
        %v702 = vadd.s32 %v697, %v699
        %vm703 = vc.u32 %v697, %v699
        %v704 = vadd.s32 %v700, 1
        %v705 = vsel %vm703, %v704, %v700
        %v706 = vadd.s32 %v701, %v705
        %v707 = vadd.s32 %v706, 536870912
        %v708 = vshrl.u32 %v707, 30
        %v709 = vshll.u32 %v708, 30
        %v710 = vsub.s32 %v706, %v709
        %vm711 = vcmp.lt.s32.totalorder %v710, 0
        %v712 = vsub.s32 0, %v710
        %v713 = vsel %vm711, %v712, %v710
        %v714 = vclz %v713
        %v715 = vsub.s32 %v714, 2
        %vm716 = vcmp.gt.s32.totalorder 0, %v715
        %v717 = vsel %vm716, 0, %v715
        %v718 = vsub.s32 32, %v717
        %v719 = vshll.u32 %v710, %v717
        %v720 = vshrl.u32 %v702, %v718
        %v721 = vor.u32 %v719, %v720
        %v722 = vsub.s32 4294967266, %v717
        %v723 = vadd.s32 %v722, 127
        %v724 = vshll.u32 %v723, 23
        %v725 = vor.u32 4788187, %v724
        %v726 = vand.u32 2147483647, %v725
        %v728 = vcvt.s32.f32 %v721
        %v729 = vmul.f32 %v728, %v726
        %v730 = vxor.u32 %v729, 2147483648
        %v731 = vsel %vm648, %v730, %v729
        %v732 = vsub.s32 4, %v708
        %v733 = vsel %vm648, %v732, %v708
        %v734 = vsel %vm647, %v645, %v731
        %v735 = vsel %vm647, 0, %v733
        %v736 = vcosq.f32.pop %v734
        %v737 = vsinq.f32.pop %v734
        %vm738 = vweird.f32 %v645
        %v739 = vand.u32 %v735, 3
        %vm740 = vcmp.lt.s32.totalorder %v739, 2
        %vm741 = vcmp.eq.s32.totalorder %v739, 0
        %v742 = vxor.u32 %v737, 2147483648
        %v743 = vsel %vm741, %v736, %v742
        %vm744 = vcmp.eq.s32.totalorder %v739, 2
        %v745 = vxor.u32 %v736, 2147483648
        %v746 = vsel %vm744, %v745, %v737
        %v747 = vsel %vm740, %v743, %v746
        %v748 = vsel %vm738, nan, %v747
        %v749 = vmul.f32 %v748, %v644
        %750 = vst [vmem:[%s280] sm:$0x1] %v749
        %s751 = sand.u32 %s182, 1
        %s752 = scalar_lea.sflag [#allocation4], %s751
        %s753 = sand.u32 %s182, 1
        %s754 = scalar_lea.vmem [#allocation6], %s753
        // Predicated region
        $region53: #{tpu_custom_call.1} parent=47 // pred_check
          %p755 = pneg %p192
        $region54: #{tpu_custom_call.1} parent=47 // pred_check_branch
          %757 = sbr.rel (%p755) target = $region56
        $region55: #{tpu_custom_call.1} parent=47 // pred_region
          %s759 = ssub.s32 16, 16
          %760 = vsyncadd %s752, %s759
          %s761 = smul.addr %s22, 16
          %s762 = scalar_lea.hbm %s7, %s761
          %s764 = sshll.u32 %s754, 4
          %s765 = int_to_ptr.vmem [resolvable:$true] %s764
          %767 = dma.vmem_to_hbm [thread:$0]  %s765, 16, %s762, %s752
        $region56: #{tpu_custom_call.1} parent=47 // pred_fallthru
          _
      $region48: #{tpu_custom_call.1} parent=5 // pred_fallthru
        _
      %p768 = scmp.le.s32.totalorder 2, %s17
      // Predicated region
      $region57: #{tpu_custom_call.1} parent=5 // pred_check
        %p769 = pneg %p768
      $region58: #{tpu_custom_call.1} parent=5 // pred_check_branch
        %771 = sbr.rel (%p769) target = $region60
      $region59: #{tpu_custom_call.1} parent=5 // pred_region
        %s772 = ssub.s32 %s17, 2
        // Predicated region
        $region61: #{tpu_custom_call.1} parent=59 // pred_check
          %p773 = pneg %p198
        $region62: #{tpu_custom_call.1} parent=59 // pred_check_branch
          %775 = sbr.rel (%p773) target = $region64
        $region63: #{tpu_custom_call.1} parent=59 // pred_region
          %s776 = sand.u32 %s183, 1
          %s777 = scalar_lea.sflag [#allocation4], %s776
          %s778 = sand.u32 %s183, 1
          %s779 = scalar_lea.vmem [#allocation6], %s778
          %780 = dma.done %s777, 16
        $region64: #{tpu_custom_call.1} parent=59 // pred_fallthru
          _
      $region60: #{tpu_custom_call.1} parent=5 // pred_fallthru
        _
    $region6: #{tpu_custom_call.1} parent=1 // loop_footer
      %s21 = sadd.s32 1, %s17
    $region7: #{tpu_custom_call.1} parent=1 // loop_footer_branch
      %16 = sbr.rel target = $region3
    $region8: #{tpu_custom_call.1} parent=1 // loop_exit
      _
    %781 = vsyncpa [#allocation4], 1
    %s782 = scalar_lea.sflag [#allocation4], 1
    %783 = vsyncpa %s782, 1
    %784 = vsyncpa [#allocation5], 1
    %s785 = scalar_lea.sflag [#allocation5], 1
    %786 = vsyncpa %s785, 1

</llo_original>
